<compile_context>
chip_gen: v7x
topology: tpu7x:2x2x1
jax: 0.10.0
libtpu: 0.0.40
codegen_flags: <defaults>
</compile_context>

<pallas_src>
import functools

import jax
import jax.numpy as jnp
from jax.experimental import pallas as pl
from jax.experimental.pallas import tpu as pltpu


# --------------------------------------------------------------------------------------
# kernel 1: smoothing convolutions (per batch step, full HW, channel-major)
# --------------------------------------------------------------------------------------
def _smoothing_kernel(def_ref, colmask_ref, w1_ref, b1_ref, w2_ref, b2_ref,
                      flow_ref, *, H, W):
    """def (2, HW) -> flow (2, HW).  Each 3x3 conv = one stacked matmul."""
    f32 = jnp.float32
    HW = H * W

    cm = colmask_ref[...]                      # (2, HW): [0] left-neighbor ok, [1] right ok
    col_l = cm[0:1, :]
    col_r = cm[1:2, :]

    def tap_stack(x):
        # x: (Cin, HW) -> (9*Cin, HW); tap k = (dy+1)*3 + (dx+1) occupies rows k*Cin+i.
        n = x.shape[0]
        z1 = jnp.zeros((n, 1), f32)
        zw = jnp.zeros((n, W), f32)
        # two lane-shifted, column-masked copies (dx = -1 / +1); border columns -> 0
        xl = jnp.concatenate([z1, x[:, :HW - 1]], axis=1) * col_l
        xr = jnp.concatenate([x[:, 1:], z1], axis=1) * col_r
        rows = []
        for a in (xl, x, xr):                  # dy = -1: shift content down one image row
            rows.append(jnp.concatenate([zw, a[:, :HW - W]], axis=1))
        rows.extend([xl, x, xr])               # dy = 0
        for a in (xl, x, xr):                  # dy = +1: shift content up one image row
            rows.append(jnp.concatenate([a[:, W:], zw], axis=1))
        return jnp.concatenate(rows, axis=0)   # (9*Cin, HW)

    d = def_ref[...].astype(f32)                                           # (2, HW)
    hidden = jnp.maximum(
        jnp.dot(w1_ref[...].astype(f32), tap_stack(d),
                preferred_element_type=f32) + b1_ref[...].astype(f32), 0.0)  # (32, HW)
    flow = jnp.dot(w2_ref[...].astype(f32), tap_stack(hidden),
                   preferred_element_type=f32) + b2_ref[...].astype(f32)     # (2, HW)
    flow_ref[...] = flow


# --------------------------------------------------------------------------------------
# kernel 2: bilinear sampling, tiled over pixels (lane axis)
# --------------------------------------------------------------------------------------
def _sampling_kernel(flow_ref, grid_ref, img_ref, out_ref, *, H, W, C, T):
    """One (batch, pixel-tile) step: warp T pixels.

    Separable bilinear: x-interp is an MXU matmul img(C*H,W) @ wxT(W,T); the y-weighted
    reduce over H is a broadcast multiply + sum on the VPU/XLU (no wyT duplication, no
    one-hot group-sum matmul).
    """
    f32 = jnp.float32
    flow = flow_ref[...].astype(f32)           # (2, T): [0]=dx, [1]=dy
    g = grid_ref[...]                          # (2, T): [0]=grid_x, [1]=grid_y

    px = jnp.clip(g[0:1, :] + flow[0:1, :], 0.0, W - 1.0)
    py = jnp.clip(g[1:2, :] + flow[1:2, :], 0.0, H - 1.0)
    x0 = jnp.floor(px); tx = px - x0; x1 = jnp.minimum(x0 + 1.0, W - 1.0)
    y0 = jnp.floor(py); ty = py - y0; y1 = jnp.minimum(y0 + 1.0, H - 1.0)

    # separable one-hot bilinear weights (exact f32 integer comparisons)
    qx = jax.lax.broadcasted_iota(f32, (W, T), 0)
    wxT = jnp.where(qx == x0, 1.0 - tx, 0.0) + jnp.where(qx == x1, tx, 0.0)   # (W, T)
    qy = jax.lax.broadcasted_iota(f32, (H, T), 0)
    wy = jnp.where(qy == y0, 1.0 - ty, 0.0) + jnp.where(qy == y1, ty, 0.0)    # (H, T)

    img = img_ref[...].astype(f32)                                   # (C*H, W)
    tmp = jnp.dot(img, wxT, preferred_element_type=f32)              # (C*H, T)
    warped = jnp.sum(tmp.reshape(C, H, T) * wy[None, :, :], axis=1)  # (C, T)
    out_ref[...] = warped.astype(out_ref.dtype)


# --------------------------------------------------------------------------------------
# wrapper
# --------------------------------------------------------------------------------------
def _pick_lane_tile(HW, CH):
    """Pixel-tile width: divides HW, multiple of 128, keeps the (C*H, T) f32 x-interp
    product around <= 8 MiB so the sampling stage fits v7x's 64 MiB VMEM with headroom."""
    target = min(4096, max(256, (8 << 20) // (CH * 4)))
    if HW <= target or HW % 128 != 0:
        return HW
    t = 128
    while t * 2 <= target and HW % (t * 2) == 0:
        t *= 2
    return t


def _vmem_limit(nbytes):
    return int(min(max(nbytes, 8 << 20), 100 << 20))


def spatial_transformation(moving_image, deformation_field, params):
    """moving_image: (B, C, H, W); deformation_field: (B, 2, H, W) -> (B, C, H, W)."""
    w1, b1, w2, b2 = params           # w1: (3,3,2,32) HWIO, w2: (3,3,32,2) HWIO
    B, C, H, W = moving_image.shape
    assert deformation_field.shape == (B, 2, H, W)
    HW = H * W
    f4 = 4  # sizeof(f32)

    # free reshapes only (no transposes / pads on activations)
    def_flat = deformation_field.reshape(B, 2, HW).astype(jnp.float32)
    img_flat = moving_image.reshape(B, C * H, W)

    # stacked tap weights: row o, column k*Cin + i with k = (dy+1)*3 + (dx+1)
    w1_mat = jnp.transpose(w1, (3, 0, 1, 2)).reshape(32, 18).astype(jnp.float32)
    w2_mat = jnp.transpose(w2, (3, 0, 1, 2)).reshape(2, 288).astype(jnp.float32)
    b1_c = b1.reshape(32, 1).astype(jnp.float32)
    b2_c = b2.reshape(2, 1).astype(jnp.float32)

    # batch-invariant per-pixel constants, hoisted out of the kernels
    p = jnp.arange(HW, dtype=jnp.int32)
    w_i = (p % W).astype(jnp.float32)
    h_i = (p // W).astype(jnp.float32)
    colmask = jnp.stack([(w_i >= 1.0).astype(jnp.float32),
                         (w_i <= W - 2.0).astype(jnp.float32)], axis=0)    # (2, HW)
    grid_xy = jnp.stack([w_i, h_i], axis=0)                                 # (2, HW)

    # ---------------- pallas_call 1: smoothing convs -> flow (B, 2, HW) ----------------
    conv_vmem = _vmem_limit(2 * (
        3 * (2 * 2 * HW * f4)                                # def / colmask / flow blocks
        + (18 + 288 + 32 + 3 * 2 + 3 * 32) * HW * f4         # tap stacks, hidden, shifts
        + (32 * 18 + 2 * 288 + 64) * f4))                    # weights / biases
    flow = pl.pallas_call(
        functools.partial(_smoothing_kernel, H=H, W=W),
        out_shape=jax.ShapeDtypeStruct((B, 2, HW), jnp.float32),
        grid_spec=pltpu.PrefetchScalarGridSpec(
            num_scalar_prefetch=0,
            grid=(B,),
            in_specs=[
                pl.BlockSpec((None, 2, HW), lambda b: (b, 0, 0)),
                pl.BlockSpec((2, HW), lambda b: (0, 0)),
                pl.BlockSpec((32, 18), lambda b: (0, 0)),
                pl.BlockSpec((32, 1), lambda b: (0, 0)),
                pl.BlockSpec((2, 288), lambda b: (0, 0)),
                pl.BlockSpec((2, 1), lambda b: (0, 0)),
            ],
            out_specs=pl.BlockSpec((None, 2, HW), lambda b: (b, 0, 0)),
        ),
        compiler_params=pltpu.CompilerParams(
            dimension_semantics=("parallel",), vmem_limit_bytes=conv_vmem),
    )(def_flat, colmask, w1_mat, b1_c, w2_mat, b2_c)

    # ------------- pallas_call 2: bilinear sampling tiled over pixel lanes -------------
    T = _pick_lane_tile(HW, C * H)
    NT = HW // T
    samp_vmem = _vmem_limit(2 * (
        2 * (2 * T * f4) * 2                                 # flow + grid blocks
        + 2 * (C * H * W * f4)                               # img blocks
        + 2 * (C * T * f4)                                   # out blocks
        + (W * T + C * H * T + H * T + 16 * T) * f4))        # wxT, tmp, wy, per-pixel tmps
    out_flat = pl.pallas_call(
        functools.partial(_sampling_kernel, H=H, W=W, C=C, T=T),
        out_shape=jax.ShapeDtypeStruct((B, C, HW), moving_image.dtype),
        grid_spec=pltpu.PrefetchScalarGridSpec(
            num_scalar_prefetch=0,
            grid=(B, NT),
            in_specs=[
                pl.BlockSpec((None, 2, T), lambda b, t: (b, 0, t)),
                pl.BlockSpec((2, T), lambda b, t: (0, t)),
                pl.BlockSpec((None, C * H, W), lambda b, t: (b, 0, 0)),
            ],
            out_specs=pl.BlockSpec((None, C, T), lambda b, t: (b, 0, t)),
        ),
        compiler_params=pltpu.CompilerParams(
            dimension_semantics=("parallel", "parallel"), vmem_limit_bytes=samp_vmem),
    )(flow, grid_xy, img_flat)

    return out_flat.reshape(B, C, H, W)


# --------------------------------------------------------------------------------------
# parameters & pure-JAX reference (for validation)
# --------------------------------------------------------------------------------------
def init_params(key):
    """Deterministic synthetic parameters mimicking nn.Conv2d default init shapes."""
    k1, k2, k3, k4 = jax.random.split(key, 4)
    lim1 = 1.0 / jnp.sqrt(2.0 * 9.0)
    w1 = jax.random.uniform(k1, (3, 3, 2, 32), jnp.float32, -lim1, lim1)   # HWIO
    b1 = jax.random.uniform(k2, (32,), jnp.float32, -lim1, lim1)
    lim2 = 1.0 / jnp.sqrt(32.0 * 9.0)
    w2 = jax.random.uniform(k3, (3, 3, 32, 2), jnp.float32, -lim2, lim2)   # HWIO
    b2 = jax.random.uniform(k4, (2,), jnp.float32, -lim2, lim2)
    return w1, b1, w2, b2


def reference_forward(moving, deform, params):
    """Pure-JAX reference of the PyTorch forward pass (for validation)."""
    w1, b1, w2, b2 = params
    w1_oihw = jnp.transpose(w1, (3, 2, 0, 1))
    w2_oihw = jnp.transpose(w2, (3, 2, 0, 1))
    h = jax.lax.conv_general_dilated(deform, w1_oihw, (1, 1), "SAME",
                                     dimension_numbers=("NCHW", "OIHW", "NCHW"))
    h = jax.nn.relu(h + b1[None, :, None, None])
    d = jax.lax.conv_general_dilated(h, w2_oihw, (1, 1), "SAME",
                                     dimension_numbers=("NCHW", "OIHW", "NCHW"))
    d = d + b2[None, :, None, None]
    B, _, H, W = d.shape
    gx = jnp.arange(W, dtype=jnp.float32)[None, None, :] + d[:, 0]
    gy = jnp.arange(H, dtype=jnp.float32)[None, :, None] + d[:, 1]
    nx = 2.0 * gx / (W - 1) - 1.0
    ny = 2.0 * gy / (H - 1) - 1.0
    px = jnp.clip((nx + 1.0) * 0.5 * (W - 1), 0.0, W - 1.0)
    py = jnp.clip((ny + 1.0) * 0.5 * (H - 1), 0.0, H - 1.0)
    x0 = jnp.floor(px); tx = px - x0
    y0 = jnp.floor(py); ty = py - y0
    x0i = x0.astype(jnp.int32); x1i = jnp.minimum(x0i + 1, W - 1)
    y0i = y0.astype(jnp.int32); y1i = jnp.minimum(y0i + 1, H - 1)

    def gather(yi, xi):
        return jax.vmap(lambda im, y, x: im[:, y, x])(moving, yi, xi)  # (B, C, H, W)

    v00 = gather(y0i, x0i); v01 = gather(y0i, x1i)
    v10 = gather(y1i, x0i); v11 = gather(y1i, x1i)
    w00 = ((1 - ty) * (1 - tx))[:, None]; w01 = ((1 - ty) * tx)[:, None]
    w10 = (ty * (1 - tx))[:, None];       w11 = (ty * tx)[:, None]
    return v00 * w00 + v01 * w01 + v10 * w10 + v11 * w11


if __name__ == "__main__":
    key = jax.random.PRNGKey(0)
    kp, km, kd = jax.random.split(key, 3)
    params = init_params(kp)

    B, C, H, W = 2, 4, 16, 16
    moving_image = jax.random.normal(km, (B, C, H, W), jnp.float32)
    deformation_field = 2.0 * jax.random.normal(kd, (B, 2, H, W), jnp.float32)

    out = spatial_transformation(moving_image, deformation_field, params)
    out = jax.block_until_ready(out)

    ref = reference_forward(moving_image, deformation_field, params)
    assert out.shape == (B, C, H, W)
    max_err = float(jnp.max(jnp.abs(out - ref)))
    assert jnp.allclose(out, ref, atol=1e-4, rtol=1e-4), f"max_err={max_err}"
    print("KERNEL_OK")
</pallas_src>

<mosaic_0001>
module attributes {stable_mosaic.version = 11 : i64} {
  func.func @_smoothing_kernel(%arg0: i32, %arg1: memref<1x2x256xf32, #tpu.memory_space<vmem>>, %arg2: memref<2x256xf32, #tpu.memory_space<vmem>>, %arg3: memref<32x18xf32, #tpu.memory_space<vmem>>, %arg4: memref<32x1xf32, #tpu.memory_space<vmem>>, %arg5: memref<2x288xf32, #tpu.memory_space<vmem>>, %arg6: memref<2x1xf32, #tpu.memory_space<vmem>>, %arg7: memref<1x2x256xf32, #tpu.memory_space<vmem>>) attributes {dimension_semantics = [#tpu.dimension_semantics<parallel>], iteration_bounds = array<i64: 2>, scalar_prefetch = 0 : i64, scratch_operands = 0 : i64, tpu.core_type = #tpu.core_type<tc>, window_params = [{transform_indices = @transform_0, window_bounds = array<i64: 1, 2, 256>}, {pipeline_mode = #tpu.pipeline_mode<synchronous>, transform_indices = @transform_1, window_bounds = array<i64: 2, 256>}, {pipeline_mode = #tpu.pipeline_mode<synchronous>, transform_indices = @transform_2, window_bounds = array<i64: 32, 18>}, {pipeline_mode = #tpu.pipeline_mode<synchronous>, transform_indices = @transform_3, window_bounds = array<i64: 32, 1>}, {pipeline_mode = #tpu.pipeline_mode<synchronous>, transform_indices = @transform_4, window_bounds = array<i64: 2, 288>}, {pipeline_mode = #tpu.pipeline_mode<synchronous>, transform_indices = @transform_5, window_bounds = array<i64: 2, 1>}, {transform_indices = @transform_6, window_bounds = array<i64: 1, 2, 256>}]} {
    %c0 = arith.constant 0 : index
    %c0_0 = arith.constant 0 : index
    %0 = vector.load %arg2[%c0, %c0_0] : memref<2x256xf32, #tpu.memory_space<vmem>>, vector<2x256xf32>
    %1 = vector.extract_strided_slice %0 {offsets = [0, 0], sizes = [1, 256], strides = [1, 1]} : vector<2x256xf32> to vector<1x256xf32>
    %2 = vector.extract_strided_slice %0 {offsets = [1, 0], sizes = [1, 256], strides = [1, 1]} : vector<2x256xf32> to vector<1x256xf32>
    %c0_1 = arith.constant 0 : index
    %c0_2 = arith.constant 0 : index
    %c0_3 = arith.constant 0 : index
    %3 = vector.load %arg1[%c0_1, %c0_2, %c0_3] : memref<1x2x256xf32, #tpu.memory_space<vmem>>, vector<1x2x256xf32>
    %4 = vector.shape_cast %3 : vector<1x2x256xf32> to vector<2x256xf32>
    %c0_4 = arith.constant 0 : index
    %c0_5 = arith.constant 0 : index
    %5 = vector.load %arg3[%c0_4, %c0_5] : memref<32x18xf32, #tpu.memory_space<vmem>>, vector<32x18xf32>
    %cst = arith.constant 0.000000e+00 : f32
    %6 = vector.broadcast %cst : f32 to vector<2x1xf32>
    %cst_6 = arith.constant 0.000000e+00 : f32
    %7 = vector.broadcast %cst_6 : f32 to vector<2x16xf32>
    %8 = vector.extract_strided_slice %4 {offsets = [0, 0], sizes = [2, 255], strides = [1, 1]} : vector<2x256xf32> to vector<2x255xf32>
    %9 = tpu.concatenate %6, %8 in 1 : vector<2x1xf32>, vector<2x255xf32> -> vector<2x256xf32>
    %10 = vector.broadcast %1 : vector<1x256xf32> to vector<2x256xf32>
    %11 = arith.mulf %9, %10 : vector<2x256xf32>
    %12 = vector.extract_strided_slice %4 {offsets = [0, 1], sizes = [2, 255], strides = [1, 1]} : vector<2x256xf32> to vector<2x255xf32>
    %13 = tpu.concatenate %12, %6 in 1 : vector<2x255xf32>, vector<2x1xf32> -> vector<2x256xf32>
    %14 = vector.broadcast %2 : vector<1x256xf32> to vector<2x256xf32>
    %15 = arith.mulf %13, %14 : vector<2x256xf32>
    %16 = vector.extract_strided_slice %11 {offsets = [0, 0], sizes = [2, 240], strides = [1, 1]} : vector<2x256xf32> to vector<2x240xf32>
    %17 = tpu.concatenate %7, %16 in 1 : vector<2x16xf32>, vector<2x240xf32> -> vector<2x256xf32>
    %18 = vector.extract_strided_slice %4 {offsets = [0, 0], sizes = [2, 240], strides = [1, 1]} : vector<2x256xf32> to vector<2x240xf32>
    %19 = tpu.concatenate %7, %18 in 1 : vector<2x16xf32>, vector<2x240xf32> -> vector<2x256xf32>
    %20 = vector.extract_strided_slice %15 {offsets = [0, 0], sizes = [2, 240], strides = [1, 1]} : vector<2x256xf32> to vector<2x240xf32>
    %21 = tpu.concatenate %7, %20 in 1 : vector<2x16xf32>, vector<2x240xf32> -> vector<2x256xf32>
    %22 = vector.extract_strided_slice %11 {offsets = [0, 16], sizes = [2, 240], strides = [1, 1]} : vector<2x256xf32> to vector<2x240xf32>
    %23 = tpu.concatenate %22, %7 in 1 : vector<2x240xf32>, vector<2x16xf32> -> vector<2x256xf32>
    %24 = vector.extract_strided_slice %4 {offsets = [0, 16], sizes = [2, 240], strides = [1, 1]} : vector<2x256xf32> to vector<2x240xf32>
    %25 = tpu.concatenate %24, %7 in 1 : vector<2x240xf32>, vector<2x16xf32> -> vector<2x256xf32>
    %26 = vector.extract_strided_slice %15 {offsets = [0, 16], sizes = [2, 240], strides = [1, 1]} : vector<2x256xf32> to vector<2x240xf32>
    %27 = tpu.concatenate %26, %7 in 1 : vector<2x240xf32>, vector<2x16xf32> -> vector<2x256xf32>
    %28 = tpu.concatenate %17, %19, %21, %11, %4, %15, %23, %25, %27 in 0 : vector<2x256xf32>, vector<2x256xf32>, vector<2x256xf32>, vector<2x256xf32>, vector<2x256xf32>, vector<2x256xf32>, vector<2x256xf32>, vector<2x256xf32>, vector<2x256xf32> -> vector<18x256xf32>
    %cst_7 = arith.constant dense<0.000000e+00> : vector<32x256xf32>
    %29 = tpu.matmul %5, %28, %cst_7 {dimension_numbers = #tpu.dot_dimension_numbers<[1], [0], [0], [1], [0, 0, 1, 1], [], []>} : vector<32x18xf32>, vector<18x256xf32>, vector<32x256xf32> -> vector<32x256xf32>
    %c0_8 = arith.constant 0 : index
    %c0_9 = arith.constant 0 : index
    %30 = vector.load %arg4[%c0_8, %c0_9] : memref<32x1xf32, #tpu.memory_space<vmem>>, vector<32x1xf32>
    %31 = vector.broadcast %30 : vector<32x1xf32> to vector<32x256xf32>
    %32 = arith.addf %29, %31 : vector<32x256xf32>
    %cst_10 = arith.constant 0.000000e+00 : f32
    %33 = vector.broadcast %cst_10 : f32 to vector<32x256xf32>
    %34 = arith.maximumf %32, %33 : vector<32x256xf32>
    %c0_11 = arith.constant 0 : index
    %c0_12 = arith.constant 0 : index
    %35 = vector.load %arg5[%c0_11, %c0_12] : memref<2x288xf32, #tpu.memory_space<vmem>>, vector<2x288xf32>
    %cst_13 = arith.constant 0.000000e+00 : f32
    %36 = vector.broadcast %cst_13 : f32 to vector<32x1xf32>
    %cst_14 = arith.constant 0.000000e+00 : f32
    %37 = vector.broadcast %cst_14 : f32 to vector<32x16xf32>
    %38 = vector.extract_strided_slice %34 {offsets = [0, 0], sizes = [32, 255], strides = [1, 1]} : vector<32x256xf32> to vector<32x255xf32>
    %39 = tpu.concatenate %36, %38 in 1 : vector<32x1xf32>, vector<32x255xf32> -> vector<32x256xf32>
    %40 = vector.broadcast %1 : vector<1x256xf32> to vector<32x256xf32>
    %41 = arith.mulf %39, %40 : vector<32x256xf32>
    %42 = vector.extract_strided_slice %34 {offsets = [0, 1], sizes = [32, 255], strides = [1, 1]} : vector<32x256xf32> to vector<32x255xf32>
    %43 = tpu.concatenate %42, %36 in 1 : vector<32x255xf32>, vector<32x1xf32> -> vector<32x256xf32>
    %44 = vector.broadcast %2 : vector<1x256xf32> to vector<32x256xf32>
    %45 = arith.mulf %43, %44 : vector<32x256xf32>
    %46 = vector.extract_strided_slice %41 {offsets = [0, 0], sizes = [32, 240], strides = [1, 1]} : vector<32x256xf32> to vector<32x240xf32>
    %47 = tpu.concatenate %37, %46 in 1 : vector<32x16xf32>, vector<32x240xf32> -> vector<32x256xf32>
    %48 = vector.extract_strided_slice %34 {offsets = [0, 0], sizes = [32, 240], strides = [1, 1]} : vector<32x256xf32> to vector<32x240xf32>
    %49 = tpu.concatenate %37, %48 in 1 : vector<32x16xf32>, vector<32x240xf32> -> vector<32x256xf32>
    %50 = vector.extract_strided_slice %45 {offsets = [0, 0], sizes = [32, 240], strides = [1, 1]} : vector<32x256xf32> to vector<32x240xf32>
    %51 = tpu.concatenate %37, %50 in 1 : vector<32x16xf32>, vector<32x240xf32> -> vector<32x256xf32>
    %52 = vector.extract_strided_slice %41 {offsets = [0, 16], sizes = [32, 240], strides = [1, 1]} : vector<32x256xf32> to vector<32x240xf32>
    %53 = tpu.concatenate %52, %37 in 1 : vector<32x240xf32>, vector<32x16xf32> -> vector<32x256xf32>
    %54 = vector.extract_strided_slice %34 {offsets = [0, 16], sizes = [32, 240], strides = [1, 1]} : vector<32x256xf32> to vector<32x240xf32>
    %55 = tpu.concatenate %54, %37 in 1 : vector<32x240xf32>, vector<32x16xf32> -> vector<32x256xf32>
    %56 = vector.extract_strided_slice %45 {offsets = [0, 16], sizes = [32, 240], strides = [1, 1]} : vector<32x256xf32> to vector<32x240xf32>
    %57 = tpu.concatenate %56, %37 in 1 : vector<32x240xf32>, vector<32x16xf32> -> vector<32x256xf32>
    %58 = tpu.concatenate %47, %49, %51, %41, %34, %45, %53, %55, %57 in 0 : vector<32x256xf32>, vector<32x256xf32>, vector<32x256xf32>, vector<32x256xf32>, vector<32x256xf32>, vector<32x256xf32>, vector<32x256xf32>, vector<32x256xf32>, vector<32x256xf32> -> vector<288x256xf32>
    %cst_15 = arith.constant dense<0.000000e+00> : vector<2x256xf32>
    %59 = tpu.matmul %35, %58, %cst_15 {dimension_numbers = #tpu.dot_dimension_numbers<[1], [0], [0], [1], [0, 0, 1, 1], [], []>} : vector<2x288xf32>, vector<288x256xf32>, vector<2x256xf32> -> vector<2x256xf32>
    %c0_16 = arith.constant 0 : index
    %c0_17 = arith.constant 0 : index
    %60 = vector.load %arg6[%c0_16, %c0_17] : memref<2x1xf32, #tpu.memory_space<vmem>>, vector<2x1xf32>
    %61 = vector.broadcast %60 : vector<2x1xf32> to vector<2x256xf32>
    %62 = arith.addf %59, %61 : vector<2x256xf32>
    %c0_18 = arith.constant 0 : index
    %c0_19 = arith.constant 0 : index
    %c0_20 = arith.constant 0 : index
    %63 = vector.load %arg7[%c0_18, %c0_19, %c0_20] : memref<1x2x256xf32, #tpu.memory_space<vmem>>, vector<1x2x256xf32>
    %64 = vector.shape_cast %63 : vector<1x2x256xf32> to vector<2x256xf32>
    %65 = vector.shape_cast %62 : vector<2x256xf32> to vector<1x2x256xf32>
    tpu.vector_store %arg7[%c0_18, %c0_19, %c0_20], %65 {strides = array<i32>} : memref<1x2x256xf32, #tpu.memory_space<vmem>>, vector<1x2x256xf32>,
    return
  }
  func.func @transform_0(%arg0: i32) -> (i32, i32, i32) {
    %c0_i32 = arith.constant 0 : i32
    %c0_i32_0 = arith.constant 0 : i32
    %c0_i32_1 = arith.constant 0 : i32
    return %arg0, %c0_i32, %c0_i32_0 : i32, i32, i32
  }
  func.func @transform_1(%arg0: i32) -> (i32, i32) {
    %c0_i32 = arith.constant 0 : i32
    %c0_i32_0 = arith.constant 0 : i32
    %c0_i32_1 = arith.constant 0 : i32
    return %c0_i32, %c0_i32_0 : i32, i32
  }
  func.func @transform_2(%arg0: i32) -> (i32, i32) {
    %c0_i32 = arith.constant 0 : i32
    %c0_i32_0 = arith.constant 0 : i32
    %c0_i32_1 = arith.constant 0 : i32
    return %c0_i32, %c0_i32_0 : i32, i32
  }
  func.func @transform_3(%arg0: i32) -> (i32, i32) {
    %c0_i32 = arith.constant 0 : i32
    %c0_i32_0 = arith.constant 0 : i32
    %c0_i32_1 = arith.constant 0 : i32
    return %c0_i32, %c0_i32_0 : i32, i32
  }
  func.func @transform_4(%arg0: i32) -> (i32, i32) {
    %c0_i32 = arith.constant 0 : i32
    %c0_i32_0 = arith.constant 0 : i32
    %c0_i32_1 = arith.constant 0 : i32
    return %c0_i32, %c0_i32_0 : i32, i32
  }
  func.func @transform_5(%arg0: i32) -> (i32, i32) {
    %c0_i32 = arith.constant 0 : i32
    %c0_i32_0 = arith.constant 0 : i32
    %c0_i32_1 = arith.constant 0 : i32
    return %c0_i32, %c0_i32_0 : i32, i32
  }
  func.func @transform_6(%arg0: i32) -> (i32, i32, i32) {
    %c0_i32 = arith.constant 0 : i32
    %c0_i32_0 = arith.constant 0 : i32
    %c0_i32_1 = arith.constant 0 : i32
    return %arg0, %c0_i32, %c0_i32_0 : i32, i32, i32
  }
}

</mosaic_0001>

<llo_original>
// kernel: tpu_custom_call.1
$region0: #{tpu_custom_call.1}
  #allocation0 [shape = 'u32[]', space=smem, size = 0x4, offset = 0x4, fixed_abs, tag = 'smem constant byte address 0x4 - core index']
  #allocation1 [shape = 'u32[144,128]{1,0:T(1,128)}', space=vmem, size = 0x12000, scoped, tag = 'internal scratch']
  %s0 = inlined_call_operand.vmem [shape: f32[2,2,256], index: 0, kind: input, shape index: {}]
  %s1 = inlined_call_operand.vmem [shape: f32[2,256], index: 1, kind: input, shape index: {}]
  %s2 = inlined_call_operand.vmem [shape: f32[32,18], index: 2, kind: input, shape index: {}]
  %s3 = inlined_call_operand.vmem [shape: f32[32,1], index: 3, kind: input, shape index: {}]
  %s4 = inlined_call_operand.vmem [shape: f32[2,288], index: 4, kind: input, shape index: {}]
  %s5 = inlined_call_operand.vmem [shape: f32[2,1], index: 5, kind: input, shape index: {}]
  %s6 = inlined_call_operand.hbm [shape: f32[2,2,256], index: 6, kind: output, shape index: {}]
  %s7 = sld [smem:[#allocation0]]
  $region57: #{tpu_custom_call.1} parent=0
    _
  %s9 = ssub.s32 1, %s7
  %s10 = scalar_select 0, %s9, %s7
  $region1: #{tpu_custom_call.1} parent=0
    #allocation2 [shape = 'u8[4096]{0}', space=vmem, size = 0x1000, scoped, tag = 'output window, operand 0']
    #allocation3 [shape = 's32[2]{0}', space=sflag, size = 0x8, scoped, tag = 'scoped memory for tpu_custom_call.1']
    %11 = vsyncpa [#allocation3], 0
    %s12 = scalar_lea.sflag [#allocation3], 1
    %13 = vsyncpa %s12, 0
    loop: start=0, step=1, limit=4
    $region2: #{tpu_custom_call.1} parent=1 // loop_pre_header
      _
    $region3: #{tpu_custom_call.1} parent=1 // loop_header
      %s15 = sphi 0, %s19
      %p16 = scmp.ge.s32.totalorder %s15, 4
      %s25 = sphi 0, %s27
      %s28 = sphi 0, %s25
      %s29 = sphi 0, %s28
      %s45 = sphi 0, %s29
      %s49 = sphi 0, %s49
      %s51 = sphi 0, %s49
      %s52 = sphi 0, %s51
      %s66 = sphi 0, %s52
      %s70 = sphi 0, %s70
      %s72 = sphi 0, %s70
      %s73 = sphi 0, %s72
      %s87 = sphi 0, %s73
      %s91 = sphi 0, %s91
      %s93 = sphi 0, %s91
      %s94 = sphi 0, %s93
      %s108 = sphi 0, %s94
      %s112 = sphi 0, %s112
      %s114 = sphi 0, %s112
      %s115 = sphi 0, %s114
      %s129 = sphi 0, %s115
      %s133 = sphi 0, %s133
      %s135 = sphi 0, %s133
      %s136 = sphi 0, %s135
      %s150 = sphi 0, %s136
      %s156 = sphi 0, %s158
      %s159 = sphi 0, %s156
      %s160 = sphi 0, %s159
      %s176 = sphi 0, %s160
    $region4: #{tpu_custom_call.1} parent=1 // loop_header_branch
      %18 = sbr.rel (%p16) target = $region8
    $region5: #{tpu_custom_call.1} parent=1 // loop_body
      %s20 = ssub.s32 %s15, 1
      %s21 = ssub.s32 %s15, 2
      %s22 = sadd.s32 %s15, 1
      %s23 = ssub.s32 %s15, %s22
      %p24 = scmp.eq.s32.totalorder %s23, 0
      %s26 = sadd.s32 %s25, 1
      %s27 = scalar_select %p24, %s25, %s26
      %p30 = pneg %p24
      %p31 = scmp.eq.s32.totalorder %s15, 1
      %p32 = por %p30, %p31
      %p33 = scmp.ne.s32.totalorder %s25, %s28
      %p34 = scmp.eq.s32.totalorder %s15, 0
      %p35 = por %p33, %p34
      %p36 = scmp.ne.s32.totalorder %s25, %s28
      %p37 = scmp.eq.s32.totalorder %s20, 1
      %p38 = por %p36, %p37
      %p39 = scmp.ne.s32.totalorder %s28, %s29
      %p40 = scmp.eq.s32.totalorder %s20, 0
      %p41 = por %p39, %p40
      %p42 = scmp.ne.s32.totalorder %s28, %s29
      %p43 = scmp.eq.s32.totalorder %s21, 1
      %p44 = por %p42, %p43
      %p46 = scmp.ne.s32.totalorder %s29, %s45
      %p47 = scmp.eq.s32.totalorder %s21, 0
      %p48 = por %p46, %p47
      %s50 = sadd.s32 %s49, 1
      %p53 = scmp.eq.s32.totalorder %s15, 1
      %p54 = scmp.ne.s32.totalorder %s49, %s51
      %p55 = scmp.eq.s32.totalorder %s15, 0
      %p56 = por %p54, %p55
      %p57 = scmp.ne.s32.totalorder %s49, %s51
      %p58 = scmp.eq.s32.totalorder %s20, 1
      %p59 = por %p57, %p58
      %p60 = scmp.ne.s32.totalorder %s51, %s52
      %p61 = scmp.eq.s32.totalorder %s20, 0
      %p62 = por %p60, %p61
      %p63 = scmp.ne.s32.totalorder %s51, %s52
      %p64 = scmp.eq.s32.totalorder %s21, 1
      %p65 = por %p63, %p64
      %p67 = scmp.ne.s32.totalorder %s52, %s66
      %p68 = scmp.eq.s32.totalorder %s21, 0
      %p69 = por %p67, %p68
      %s71 = sadd.s32 %s70, 1
      %p74 = scmp.eq.s32.totalorder %s15, 1
      %p75 = scmp.ne.s32.totalorder %s70, %s72
      %p76 = scmp.eq.s32.totalorder %s15, 0
      %p77 = por %p75, %p76
      %p78 = scmp.ne.s32.totalorder %s70, %s72
      %p79 = scmp.eq.s32.totalorder %s20, 1
      %p80 = por %p78, %p79
      %p81 = scmp.ne.s32.totalorder %s72, %s73
      %p82 = scmp.eq.s32.totalorder %s20, 0
      %p83 = por %p81, %p82
      %p84 = scmp.ne.s32.totalorder %s72, %s73
      %p85 = scmp.eq.s32.totalorder %s21, 1
      %p86 = por %p84, %p85
      %p88 = scmp.ne.s32.totalorder %s73, %s87
      %p89 = scmp.eq.s32.totalorder %s21, 0
      %p90 = por %p88, %p89
      %s92 = sadd.s32 %s91, 1
      %p95 = scmp.eq.s32.totalorder %s15, 1
      %p96 = scmp.ne.s32.totalorder %s91, %s93
      %p97 = scmp.eq.s32.totalorder %s15, 0
      %p98 = por %p96, %p97
      %p99 = scmp.ne.s32.totalorder %s91, %s93
      %p100 = scmp.eq.s32.totalorder %s20, 1
      %p101 = por %p99, %p100
      %p102 = scmp.ne.s32.totalorder %s93, %s94
      %p103 = scmp.eq.s32.totalorder %s20, 0
      %p104 = por %p102, %p103
      %p105 = scmp.ne.s32.totalorder %s93, %s94
      %p106 = scmp.eq.s32.totalorder %s21, 1
      %p107 = por %p105, %p106
      %p109 = scmp.ne.s32.totalorder %s94, %s108
      %p110 = scmp.eq.s32.totalorder %s21, 0
      %p111 = por %p109, %p110
      %s113 = sadd.s32 %s112, 1
      %p116 = scmp.eq.s32.totalorder %s15, 1
      %p117 = scmp.ne.s32.totalorder %s112, %s114
      %p118 = scmp.eq.s32.totalorder %s15, 0
      %p119 = por %p117, %p118
      %p120 = scmp.ne.s32.totalorder %s112, %s114
      %p121 = scmp.eq.s32.totalorder %s20, 1
      %p122 = por %p120, %p121
      %p123 = scmp.ne.s32.totalorder %s114, %s115
      %p124 = scmp.eq.s32.totalorder %s20, 0
      %p125 = por %p123, %p124
      %p126 = scmp.ne.s32.totalorder %s114, %s115
      %p127 = scmp.eq.s32.totalorder %s21, 1
      %p128 = por %p126, %p127
      %p130 = scmp.ne.s32.totalorder %s115, %s129
      %p131 = scmp.eq.s32.totalorder %s21, 0
      %p132 = por %p130, %p131
      %s134 = sadd.s32 %s133, 1
      %p137 = scmp.eq.s32.totalorder %s15, 1
      %p138 = scmp.ne.s32.totalorder %s133, %s135
      %p139 = scmp.eq.s32.totalorder %s15, 0
      %p140 = por %p138, %p139
      %p141 = scmp.ne.s32.totalorder %s133, %s135
      %p142 = scmp.eq.s32.totalorder %s20, 1
      %p143 = por %p141, %p142
      %p144 = scmp.ne.s32.totalorder %s135, %s136
      %p145 = scmp.eq.s32.totalorder %s20, 0
      %p146 = por %p144, %p145
      %p147 = scmp.ne.s32.totalorder %s135, %s136
      %p148 = scmp.eq.s32.totalorder %s21, 1
      %p149 = por %p147, %p148
      %p151 = scmp.ne.s32.totalorder %s136, %s150
      %p152 = scmp.eq.s32.totalorder %s21, 0
      %p153 = por %p151, %p152
      %s154 = ssub.s32 %s15, %s22
      %p155 = scmp.eq.s32.totalorder %s154, 0
      %s157 = sadd.s32 %s156, 1
      %s158 = scalar_select %p155, %s156, %s157
      %p161 = pneg %p155
      %p162 = scmp.eq.s32.totalorder %s15, 1
      %p163 = por %p161, %p162
      %p164 = scmp.ne.s32.totalorder %s156, %s159
      %p165 = scmp.eq.s32.totalorder %s15, 0
      %p166 = por %p164, %p165
      %p167 = scmp.ne.s32.totalorder %s156, %s159
      %p168 = scmp.eq.s32.totalorder %s20, 1
      %p169 = por %p167, %p168
      %p170 = scmp.ne.s32.totalorder %s159, %s160
      %p171 = scmp.eq.s32.totalorder %s20, 0
      %p172 = por %p170, %p171
      %p173 = scmp.ne.s32.totalorder %s159, %s160
      %p174 = scmp.eq.s32.totalorder %s21, 1
      %p175 = por %p173, %p174
      %p177 = scmp.ne.s32.totalorder %s160, %s176
      %p178 = scmp.eq.s32.totalorder %s21, 0
      %p179 = por %p177, %p178
      %p180 = scmp.le.s32.totalorder 1, %s15
      %p181 = scmp.lt.s32.totalorder %s15, 3
      %p182 = pnand %p180, %p181
      %p183 = pneg %p182
      // Predicated region
      $region9: #{tpu_custom_call.1} parent=5 // pred_check
        _
      $region10: #{tpu_custom_call.1} parent=5 // pred_check_branch
        %185 = sbr.rel (%p182) target = $region12
      $region11: #{tpu_custom_call.1} parent=5 // pred_region
        %s186 = ssub.s32 %s15, 1
        // Predicated region
        $region13: #{tpu_custom_call.1} parent=11 // pred_check
          %p187 = pneg %p62
        $region14: #{tpu_custom_call.1} parent=11 // pred_check_branch
          %189 = sbr.rel (%p187) target = $region16
        $region15: #{tpu_custom_call.1} parent=11 // pred_region
          _
        $region16: #{tpu_custom_call.1} parent=11 // pred_fallthru
          _
        // Predicated region
        $region17: #{tpu_custom_call.1} parent=11 // pred_check
          %p190 = pneg %p83
        $region18: #{tpu_custom_call.1} parent=11 // pred_check_branch
          %192 = sbr.rel (%p190) target = $region20
        $region19: #{tpu_custom_call.1} parent=11 // pred_region
          _
        $region20: #{tpu_custom_call.1} parent=11 // pred_fallthru
          _
        // Predicated region
        $region21: #{tpu_custom_call.1} parent=11 // pred_check
          %p193 = pneg %p104
        $region22: #{tpu_custom_call.1} parent=11 // pred_check_branch
          %195 = sbr.rel (%p193) target = $region24
        $region23: #{tpu_custom_call.1} parent=11 // pred_region
          _
        $region24: #{tpu_custom_call.1} parent=11 // pred_fallthru
          _
        // Predicated region
        $region25: #{tpu_custom_call.1} parent=11 // pred_check
          %p196 = pneg %p125
        $region26: #{tpu_custom_call.1} parent=11 // pred_check_branch
          %198 = sbr.rel (%p196) target = $region28
        $region27: #{tpu_custom_call.1} parent=11 // pred_region
          _
        $region28: #{tpu_custom_call.1} parent=11 // pred_fallthru
          _
        // Predicated region
        $region29: #{tpu_custom_call.1} parent=11 // pred_check
          %p199 = pneg %p146
        $region30: #{tpu_custom_call.1} parent=11 // pred_check_branch
          %201 = sbr.rel (%p199) target = $region32
        $region31: #{tpu_custom_call.1} parent=11 // pred_region
          _
        $region32: #{tpu_custom_call.1} parent=11 // pred_fallthru
          _
      $region12: #{tpu_custom_call.1} parent=5 // pred_fallthru
        _
      %p202 = scmp.lt.s32.totalorder %s15, 2
      // Predicated region
      $region33: #{tpu_custom_call.1} parent=5 // pred_check
        %p203 = pneg %p202
      $region34: #{tpu_custom_call.1} parent=5 // pred_check_branch
        %205 = sbr.rel (%p203) target = $region36
      $region35: #{tpu_custom_call.1} parent=5 // pred_region
        // Predicated region
        $region37: #{tpu_custom_call.1} parent=35 // pred_check
          %p206 = pneg %p35
        $region38: #{tpu_custom_call.1} parent=35 // pred_check_branch
          %208 = sbr.rel (%p206) target = $region40
        $region39: #{tpu_custom_call.1} parent=35 // pred_region
          %p209 = scmp.lt.s32.totalorder %s15, 1
          %s210 = scalar_select %p209, %s15, 1
          %s211 = smul.addr %s210, 2
          %s212 = smul.addr %s211, 2
          %s213 = scalar_lea.vmem %s0, %s212
        $region40: #{tpu_custom_call.1} parent=35 // pred_fallthru
          _
      $region36: #{tpu_custom_call.1} parent=5 // pred_fallthru
        _
      %p214 = scmp.le.s32.totalorder 1, %s15
      %p215 = scmp.lt.s32.totalorder %s15, 3
      %p216 = pnand %p214, %p215
      %p217 = pneg %p216
      // Predicated region
      $region41: #{tpu_custom_call.1} parent=5 // pred_check
        _
      $region42: #{tpu_custom_call.1} parent=5 // pred_check_branch
        %219 = sbr.rel (%p216) target = $region44
      $region43: #{tpu_custom_call.1} parent=5 // pred_region
        %s220 = ssub.s32 %s15, 1
        %p221 = scmp.lt.s32.totalorder %s20, 1
        %s222 = scalar_select %p221, %s20, 1
        %s223 = smul.addr %s222, 2
        %s224 = smul.addr %s223, 2
        %s225 = scalar_lea.vmem %s0, %s224
        %p226 = pneg %p41
        %p227 = pneg %p38
        %p228 = pneg %p62
        %p229 = pneg %p59
        %p230 = pneg %p83
        %p231 = pneg %p80
        %p232 = pneg %p104
        %p233 = pneg %p101
        %p234 = pneg %p125
        %p235 = pneg %p122
        %p236 = pneg %p146
        %p237 = pneg %p143
        %p238 = pneg %p172
        %p239 = pneg %p169
        %s240 = sand.u32 %s159, 1
        %s241 = scalar_lea.sflag [#allocation3], %s240
        %s242 = sand.u32 %s159, 1
        %s243 = smul.addr %s242, 4
        %s244 = scalar_lea.vmem [#allocation2], %s243
        %p245 = scmp.lt.s32.totalorder %s20, 1
        %s246 = scalar_select %p245, %s20, 1
        %s247 = smul.addr %s246, 2
        %s248 = smul.addr %s247, 2
        %s249 = scalar_lea.vmem %s0, %s248
        %v250 = vld [vmem:[%s1] sm:$0xf]
        %v251 = vld [vmem:[%s249] sm:$0xf]
        %v252 = vld [vmem:[%s2] sm:$0xff]
        %v253 = vld [vmem:[%s2 + $0x8] sm:$0xff]
        %v254 = vld [vmem:[%s2 + $0x10] sm:$0xff]
        %v255 = vld [vmem:[%s2 + $0x18] sm:$0xff]
        %v258 = vunpack.c.l.s4 1983009808
        %v259 = vunpack.c.0.s8 %v258
        %v260 = vlaneseq
        %v261 = vshrl.u32 %v260, 7
        %v262 = vsub.s32 %v259, %v261
        %v263 = vrot.slane %v251, %v262
        %v264 = vcombine.high %v263, %v263
        %265 = vrot.lane.b32.xlu0 %v263, 1
        %v266 = vpop.permute.xlu0 %265
        %267 = vrot.lane.b32.xlu0 %v264, 1
        %v268 = vpop.permute.xlu0 %267
        %vm269 = vcmask 7168
        %v270 = vsel %vm269, %v266, %v268
        %v273 = vsel %vm269, 0.0, %v266
        %v275 = vlaneseq
        %v276 = vshrl.u32 %v275, 7
        %v277 = vsub.s32 0, %v276
        %v278 = vrot.slane %v250, %v277
        %v279 = vlaneseq
        %v280 = vshrl.u32 %v279, 7
        %v281 = vsub.s32 2, %v280
        %v282 = vrot.slane %v250, %v281
        %v285 = vlaneseq
        %v286 = vshrl.u32 %v285, 7
        %v287 = vsub.s32 0, %v286
        %v288 = vrot.slane %v278, %v287
        %v289 = vlaneseq
        %v290 = vshrl.u32 %v289, 7
        %v291 = vsub.s32 0, %v290
        %v292 = vrot.slane %v282, %v291
        %v293 = vmul.f32 %v273, %v288
        %v294 = vmul.f32 %v270, %v292
        %295 = vrot.lane.b32.xlu0 %v263, 127
        %v296 = vpop.permute.xlu0 %295
        %297 = vrot.lane.b32.xlu0 %v264, 127
        %v298 = vpop.permute.xlu0 %297
        %vm299 = vcmask 1039360
        %v300 = vsel %vm299, %v296, %v298
        %v303 = vsel %vm299, %v298, 0.0
        %v304 = vlaneseq
        %v305 = vshrl.u32 %v304, 7
        %v306 = vsub.s32 1, %v305
        %v307 = vrot.slane %v250, %v306
        %v308 = vlaneseq
        %v309 = vshrl.u32 %v308, 7
        %v310 = vsub.s32 3, %v309
        %v311 = vrot.slane %v250, %v310
        %v314 = vlaneseq
        %v315 = vshrl.u32 %v314, 7
        %v316 = vsub.s32 1, %v315
        %v317 = vrot.slane %v307, %v316
        %v318 = vlaneseq
        %v319 = vshrl.u32 %v318, 7
        %v320 = vsub.s32 1, %v319
        %v321 = vrot.slane %v311, %v320
        %v322 = vmul.f32 %v300, %v317
        %v323 = vmul.f32 %v303, %v321
        %326 = vrot.lane.b32.xlu0 %v293, 16
        %v327 = vpop.permute.xlu0 %326
        %328 = vrot.lane.b32.xlu0 %v294, 16
        %v329 = vpop.permute.xlu0 %328
        %vm330 = vcmask 130048
        %v331 = vsel %vm330, %v327, %v329
        %v334 = vsel %vm330, 0.0, %v327
        %335 = vrot.lane.b32.xlu0 %v263, 16
        %v336 = vpop.permute.xlu0 %335
        %337 = vrot.lane.b32.xlu0 %v264, 16
        %v338 = vpop.permute.xlu0 %337
        %v339 = vsel %vm330, %v336, %v338
        %v341 = vsel %vm330, 0.0, %v336
        %344 = vrot.lane.b32.xlu0 %v322, 16
        %v345 = vpop.permute.xlu0 %344
        %346 = vrot.lane.b32.xlu0 %v323, 16
        %v347 = vpop.permute.xlu0 %346
        %v348 = vsel %vm330, %v345, %v347
        %v350 = vsel %vm330, 0.0, %v345
        %351 = vrot.lane.b32.xlu0 %v293, 112
        %v352 = vpop.permute.xlu0 %351
        %353 = vrot.lane.b32.xlu0 %v294, 112
        %v354 = vpop.permute.xlu0 %353
        %vm355 = vcmask 916480
        %v356 = vsel %vm355, %v352, %v354
        %v358 = vsel %vm355, %v354, 0.0
        %359 = vrot.lane.b32.xlu0 %v263, 112
        %v360 = vpop.permute.xlu0 %359
        %361 = vrot.lane.b32.xlu0 %v264, 112
        %v362 = vpop.permute.xlu0 %361
        %v363 = vsel %vm355, %v360, %v362
        %v365 = vsel %vm355, %v362, 0.0
        %366 = vrot.lane.b32.xlu0 %v322, 112
        %v367 = vpop.permute.xlu0 %366
        %368 = vrot.lane.b32.xlu0 %v323, 112
        %v369 = vpop.permute.xlu0 %368
        %v370 = vsel %vm355, %v367, %v369
        %v372 = vsel %vm355, %v369, 0.0
        %v374 = vrot.slane %v341, 6
        %v375 = vrot.slane %v339, 6
        %v379 = vrot.slane %v350, 4
        %v380 = vrot.slane %v348, 4
        %v383 = vrot.slane %v293, 2
        %v384 = vrot.slane %v294, 2
        %v389 = vrot.slane %v322, 6
        %v390 = vrot.slane %v323, 6
        %v394 = vrot.slane %v356, 4
        %v395 = vrot.slane %v358, 4
        %v399 = vrot.slane %v363, 2
        %v400 = vrot.slane %v365, 2
        %vm403 = vcmask 1041408
        %v404 = vsel %vm403, %v334, %v374
        %v405 = vsel %vm403, %v331, %v375
        %vm406 = vcmask 1043456
        %v407 = vsel %vm406, %v404, %v379
        %v408 = vsel %vm406, %v405, %v380
        %vm409 = vcmask 1045504
        %v410 = vsel %vm409, %v407, %v383
        %v411 = vsel %vm409, %v408, %v384
        %v412 = vsel %vm403, %v263, %v389
        %v413 = vsel %vm403, %v264, %v390
        %v414 = vsel %vm406, %v412, %v394
        %v415 = vsel %vm406, %v413, %v395
        %v416 = vsel %vm409, %v414, %v399
        %v417 = vsel %vm409, %v415, %v400
        %v418 = vld [vmem:[%s3] sm:$0xff]
        %v419 = vld [vmem:[%s3 + $0x8] sm:$0xff]
        %v420 = vld [vmem:[%s3 + $0x10] sm:$0xff]
        %v421 = vld [vmem:[%s3 + $0x18] sm:$0xff]
        %423 = vset.pattern.permute.xlu0 0
        %424 = vperm.xlu0 %423, %v418
        %v425 = vpop.permute.xlu0 %424
        %428 = vset.pattern.permute.xlu0 0
        %429 = vperm.xlu0 %428, %v419
        %v430 = vpop.permute.xlu0 %429
        %433 = vset.pattern.permute.xlu0 0
        %434 = vperm.xlu0 %433, %v420
        %v435 = vpop.permute.xlu0 %434
        %438 = vset.pattern.permute.xlu0 0
        %439 = vperm.xlu0 %438, %v421
        %v440 = vpop.permute.xlu0 %439
        %vm442 = vcmask 146432
        %v444 = vsel %vm442, %v252, 0
        %v447 = vsel %vm442, %v253, 0
        %v450 = vsel %vm442, %v254, 0
        %v453 = vsel %vm442, %v255, 0
        %v455 = vsel %vm403, %v370, 0
        %v458 = vsel %vm403, %v372, 0
        %460 = vmatprep.subr.mxu0 %v411
        %461 = vmatpush1.msra.mxu0 %v410
        %462 = vmatprep.subr.mxu0 %v417
        %463 = vmatpush1.msra.mxu0 %v416
        %464 = vmatprep.subr.mxu0 %v458
        %465 = vmatpush1.msra.mxu0 %v455
        %466 = vmatprep.subr.mxu0 0.0
        %467 = vmatpush1.msra.mxu0 0.0
        %468 = vmatprep.subr.mxu0 0.0
        %469 = vmatpush1.msra.mxu0 0.0
        %470 = vmatprep.subr.mxu0 0.0
        %471 = vmatpush1.msra.mxu0 0.0
        %472 = vmatprep.subr.mxu0 0.0
        %473 = vmatpush1.msra.mxu0 0.0
        %474 = vmatprep.subr.mxu0 0.0
        %475 = vmatpush1.msra.mxu0 0.0
        %476 = vmatprep.subr.mxu0 0.0
        %477 = vmatpush1.msra.mxu0 0.0
        %478 = vmatprep.subr.mxu0 0.0
        %479 = vmatpush1.msra.mxu0 0.0
        %480 = vmatprep.subr.mxu0 0.0
        %481 = vmatpush1.msra.mxu0 0.0
        %482 = vmatprep.subr.mxu0 0.0
        %483 = vmatpush1.msra.mxu0 0.0
        %484 = vmatprep.subr.mxu0 0.0
        %485 = vmatpush1.msra.mxu0 0.0
        %486 = vmatprep.subr.mxu0 0.0
        %487 = vmatpush1.msra.mxu0 0.0
        %488 = vmatprep.subr.mxu0 0.0
        %489 = vmatpush1.msra.mxu0 0.0
        %490 = vmatprep.subr.mxu0 0.0
        %491 = vmatpush1.msra.mxu0 0.0
        %492 = vmatprep.subr.mxu0 0.0
        %493 = vmatpush1.msra.mxu0 0.0
        %494 = vmatprep.subr.mxu0 0.0
        %495 = vmatpush1.msra.mxu0 0.0
        %496 = vmatprep.subr.mxu0 0.0
        %497 = vmatpush1.msra.mxu0 0.0
        %498 = vmatprep.subr.mxu0 0.0
        %499 = vmatpush1.msra.mxu0 0.0
        %500 = vmatprep.subr.mxu0 0.0
        %501 = vmatpush1.msra.mxu0 0.0
        %502 = vmatprep.subr.mxu0 0.0
        %503 = vmatpush1.msra.mxu0 0.0
        %504 = vmatprep.subr.mxu0 0.0
        %505 = vmatpush1.msra.mxu0 0.0
        %506 = vmatprep.subr.mxu0 0.0
        %507 = vmatpush1.msra.mxu0 0.0
        %508 = vmatprep.subr.mxu0 0.0
        %509 = vmatpush1.msra.mxu0 0.0
        %510 = vmatprep.subr.mxu0 0.0
        %511 = vmatpush1.msra.mxu0 0.0
        %512 = vmatprep.subr.mxu0 0.0
        %513 = vmatpush1.msra.mxu0 0.0
        %514 = vmatprep.subr.mxu0 0.0
        %515 = vmatpush1.msra.mxu0 0.0
        %516 = vmatprep.subr.mxu0 0.0
        %517 = vmatpush1.msra.mxu0 0.0
        %518 = vmatprep.subr.mxu0 0.0
        %519 = vmatpush1.msra.mxu0 0.0
        %520 = vmatprep.subr.mxu0 0.0
        %521 = vmatpush1.msra.mxu0 0.0
        %522 = vmatprep.subr.mxu0 0.0
        %523 = vmatpush1.msra.mxu0 0.0
        %524 = vmatprep.mubr.f32.mxu0 0.0
        %525 = vmatmul.mubr.f32.gmra.mrb[0].mxu0 %v444
        %v526 = vpop.f32.mrb[0].mxu0
        %v527 = vadd.f32 %v425, %v526
        %v528 = vpop.f32.mrb[0].mxu0
        %v529 = vadd.f32 %v425, %v528
        %530 = vmatprep.mubr.f32.mxu0 0.0
        %531 = vmatmul.mubr.f32.gmra.mrb[0].mxu0 %v447
        %v532 = vpop.f32.mrb[0].mxu0
        %v533 = vadd.f32 %v430, %v532
        %v534 = vpop.f32.mrb[0].mxu0
        %v535 = vadd.f32 %v430, %v534
        %536 = vmatprep.mubr.f32.mxu0 0.0
        %537 = vmatmul.mubr.f32.gmra.mrb[0].mxu0 %v450
        %v538 = vpop.f32.mrb[0].mxu0
        %v539 = vadd.f32 %v435, %v538
        %v540 = vpop.f32.mrb[0].mxu0
        %v541 = vadd.f32 %v435, %v540
        %542 = vmatprep.mubr.f32.mxu0 0.0
        %543 = vmatmul.mubr.f32.gmra.mrb[0].mxu0 %v453
        %v544 = vpop.f32.mrb[0].mxu0
        %v545 = vadd.f32 %v440, %v544
        %v546 = vpop.f32.mrb[0].mxu0
        %v547 = vadd.f32 %v440, %v546
        %548 = vdwg.mxu0
        %v549 = vmax.f32 %v527, 0.0
        %v550 = vmax.f32 %v529, 0.0
        %v551 = vmax.f32 %v533, 0.0
        %v552 = vmax.f32 %v535, 0.0
        %v553 = vmax.f32 %v539, 0.0
        %v554 = vmax.f32 %v541, 0.0
        %v555 = vmax.f32 %v545, 0.0
        %v556 = vmax.f32 %v547, 0.0
        %v557 = vld [vmem:[%s4] sm:$0x3f]
        %566 = vrot.lane.b32.xlu0 %v549, 1
        %v567 = vpop.permute.xlu0 %566
        %568 = vrot.lane.b32.xlu0 %v550, 1
        %v569 = vpop.permute.xlu0 %568
        %570 = vrot.lane.b32.xlu0 %v551, 1
        %v571 = vpop.permute.xlu0 %570
        %572 = vrot.lane.b32.xlu0 %v552, 1
        %v573 = vpop.permute.xlu0 %572
        %574 = vrot.lane.b32.xlu0 %v553, 1
        %v575 = vpop.permute.xlu0 %574
        %576 = vrot.lane.b32.xlu0 %v554, 1
        %v577 = vpop.permute.xlu0 %576
        %578 = vrot.lane.b32.xlu0 %v555, 1
        %v579 = vpop.permute.xlu0 %578
        %580 = vrot.lane.b32.xlu0 %v556, 1
        %v581 = vpop.permute.xlu0 %580
        %v582 = vsel %vm269, %v567, %v569
        %v583 = vsel %vm269, %v571, %v573
        %v584 = vsel %vm269, %v575, %v577
        %v585 = vsel %vm269, %v579, %v581
        %v594 = vsel %vm269, 0.0, %v567
        %v595 = vsel %vm269, 0.0, %v571
        %v596 = vsel %vm269, 0.0, %v575
        %v597 = vsel %vm269, 0.0, %v579
        %v598 = vmul.f32 %v594, %v288
        %v599 = vmul.f32 %v582, %v292
        %v600 = vmul.f32 %v595, %v288
        %v601 = vmul.f32 %v583, %v292
        %v602 = vmul.f32 %v596, %v288
        %v603 = vmul.f32 %v584, %v292
        %v604 = vmul.f32 %v597, %v288
        %v605 = vmul.f32 %v585, %v292
        %606 = vrot.lane.b32.xlu0 %v549, 127
        %v607 = vpop.permute.xlu0 %606
        %608 = vrot.lane.b32.xlu0 %v550, 127
        %v609 = vpop.permute.xlu0 %608
        %610 = vrot.lane.b32.xlu0 %v551, 127
        %v611 = vpop.permute.xlu0 %610
        %612 = vrot.lane.b32.xlu0 %v552, 127
        %v613 = vpop.permute.xlu0 %612
        %614 = vrot.lane.b32.xlu0 %v553, 127
        %v615 = vpop.permute.xlu0 %614
        %616 = vrot.lane.b32.xlu0 %v554, 127
        %v617 = vpop.permute.xlu0 %616
        %618 = vrot.lane.b32.xlu0 %v555, 127
        %v619 = vpop.permute.xlu0 %618
        %620 = vrot.lane.b32.xlu0 %v556, 127
        %v621 = vpop.permute.xlu0 %620
        %v622 = vsel %vm299, %v607, %v609
        %v623 = vsel %vm299, %v611, %v613
        %v624 = vsel %vm299, %v615, %v617
        %v625 = vsel %vm299, %v619, %v621
        %v634 = vsel %vm299, %v609, 0.0
        %v635 = vsel %vm299, %v613, 0.0
        %v636 = vsel %vm299, %v617, 0.0
        %v637 = vsel %vm299, %v621, 0.0
        %v638 = vmul.f32 %v622, %v317
        %v639 = vmul.f32 %v634, %v321
        %v640 = vmul.f32 %v623, %v317
        %v641 = vmul.f32 %v635, %v321
        %v642 = vmul.f32 %v624, %v317
        %v643 = vmul.f32 %v636, %v321
        %v644 = vmul.f32 %v625, %v317
        %v645 = vmul.f32 %v637, %v321
        %654 = vrot.lane.b32.xlu0 %v598, 16
        %v655 = vpop.permute.xlu0 %654
        %656 = vrot.lane.b32.xlu0 %v599, 16
        %v657 = vpop.permute.xlu0 %656
        %658 = vrot.lane.b32.xlu0 %v600, 16
        %v659 = vpop.permute.xlu0 %658
        %660 = vrot.lane.b32.xlu0 %v601, 16
        %v661 = vpop.permute.xlu0 %660
        %662 = vrot.lane.b32.xlu0 %v602, 16
        %v663 = vpop.permute.xlu0 %662
        %664 = vrot.lane.b32.xlu0 %v603, 16
        %v665 = vpop.permute.xlu0 %664
        %666 = vrot.lane.b32.xlu0 %v604, 16
        %v667 = vpop.permute.xlu0 %666
        %668 = vrot.lane.b32.xlu0 %v605, 16
        %v669 = vpop.permute.xlu0 %668
        %v670 = vsel %vm330, %v655, %v657
        %v671 = vsel %vm330, %v659, %v661
        %v672 = vsel %vm330, %v663, %v665
        %v673 = vsel %vm330, %v667, %v669
        %v682 = vsel %vm330, 0.0, %v655
        %v683 = vsel %vm330, 0.0, %v659
        %v684 = vsel %vm330, 0.0, %v663
        %v685 = vsel %vm330, 0.0, %v667
        %686 = vrot.lane.b32.xlu0 %v549, 16
        %v687 = vpop.permute.xlu0 %686
        %688 = vrot.lane.b32.xlu0 %v550, 16
        %v689 = vpop.permute.xlu0 %688
        %690 = vrot.lane.b32.xlu0 %v551, 16
        %v691 = vpop.permute.xlu0 %690
        %692 = vrot.lane.b32.xlu0 %v552, 16
        %v693 = vpop.permute.xlu0 %692
        %694 = vrot.lane.b32.xlu0 %v553, 16
        %v695 = vpop.permute.xlu0 %694
        %696 = vrot.lane.b32.xlu0 %v554, 16
        %v697 = vpop.permute.xlu0 %696
        %698 = vrot.lane.b32.xlu0 %v555, 16
        %v699 = vpop.permute.xlu0 %698
        %700 = vrot.lane.b32.xlu0 %v556, 16
        %v701 = vpop.permute.xlu0 %700
        %v702 = vsel %vm330, %v687, %v689
        %v703 = vsel %vm330, %v691, %v693
        %v704 = vsel %vm330, %v695, %v697
        %v705 = vsel %vm330, %v699, %v701
        %v714 = vsel %vm330, 0.0, %v687
        %v715 = vsel %vm330, 0.0, %v691
        %v716 = vsel %vm330, 0.0, %v695
        %v717 = vsel %vm330, 0.0, %v699
        %726 = vrot.lane.b32.xlu0 %v638, 16
        %v727 = vpop.permute.xlu0 %726
        %728 = vrot.lane.b32.xlu0 %v639, 16
        %v729 = vpop.permute.xlu0 %728
        %730 = vrot.lane.b32.xlu0 %v640, 16
        %v731 = vpop.permute.xlu0 %730
        %732 = vrot.lane.b32.xlu0 %v641, 16
        %v733 = vpop.permute.xlu0 %732
        %734 = vrot.lane.b32.xlu0 %v642, 16
        %v735 = vpop.permute.xlu0 %734
        %736 = vrot.lane.b32.xlu0 %v643, 16
        %v737 = vpop.permute.xlu0 %736
        %738 = vrot.lane.b32.xlu0 %v644, 16
        %v739 = vpop.permute.xlu0 %738
        %740 = vrot.lane.b32.xlu0 %v645, 16
        %v741 = vpop.permute.xlu0 %740
        %v742 = vsel %vm330, %v727, %v729
        %v743 = vsel %vm330, %v731, %v733
        %v744 = vsel %vm330, %v735, %v737
        %v745 = vsel %vm330, %v739, %v741
        %v754 = vsel %vm330, 0.0, %v727
        %v755 = vsel %vm330, 0.0, %v731
        %v756 = vsel %vm330, 0.0, %v735
        %v757 = vsel %vm330, 0.0, %v739
        %758 = vrot.lane.b32.xlu0 %v598, 112
        %v759 = vpop.permute.xlu0 %758
        %760 = vrot.lane.b32.xlu0 %v599, 112
        %v761 = vpop.permute.xlu0 %760
        %762 = vrot.lane.b32.xlu0 %v600, 112
        %v763 = vpop.permute.xlu0 %762
        %764 = vrot.lane.b32.xlu0 %v601, 112
        %v765 = vpop.permute.xlu0 %764
        %766 = vrot.lane.b32.xlu0 %v602, 112
        %v767 = vpop.permute.xlu0 %766
        %768 = vrot.lane.b32.xlu0 %v603, 112
        %v769 = vpop.permute.xlu0 %768
        %770 = vrot.lane.b32.xlu0 %v604, 112
        %v771 = vpop.permute.xlu0 %770
        %772 = vrot.lane.b32.xlu0 %v605, 112
        %v773 = vpop.permute.xlu0 %772
        %v774 = vsel %vm355, %v759, %v761
        %v775 = vsel %vm355, %v763, %v765
        %v776 = vsel %vm355, %v767, %v769
        %v777 = vsel %vm355, %v771, %v773
        %v786 = vsel %vm355, %v761, 0.0
        %v787 = vsel %vm355, %v765, 0.0
        %v788 = vsel %vm355, %v769, 0.0
        %v789 = vsel %vm355, %v773, 0.0
        %790 = vrot.lane.b32.xlu0 %v549, 112
        %v791 = vpop.permute.xlu0 %790
        %792 = vrot.lane.b32.xlu0 %v550, 112
        %v793 = vpop.permute.xlu0 %792
        %794 = vrot.lane.b32.xlu0 %v551, 112
        %v795 = vpop.permute.xlu0 %794
        %796 = vrot.lane.b32.xlu0 %v552, 112
        %v797 = vpop.permute.xlu0 %796
        %798 = vrot.lane.b32.xlu0 %v553, 112
        %v799 = vpop.permute.xlu0 %798
        %800 = vrot.lane.b32.xlu0 %v554, 112
        %v801 = vpop.permute.xlu0 %800
        %802 = vrot.lane.b32.xlu0 %v555, 112
        %v803 = vpop.permute.xlu0 %802
        %804 = vrot.lane.b32.xlu0 %v556, 112
        %v805 = vpop.permute.xlu0 %804
        %v806 = vsel %vm355, %v791, %v793
        %v807 = vsel %vm355, %v795, %v797
        %v808 = vsel %vm355, %v799, %v801
        %v809 = vsel %vm355, %v803, %v805
        %v818 = vsel %vm355, %v793, 0.0
        %v819 = vsel %vm355, %v797, 0.0
        %v820 = vsel %vm355, %v801, 0.0
        %v821 = vsel %vm355, %v805, 0.0
        %822 = vrot.lane.b32.xlu0 %v638, 112
        %v823 = vpop.permute.xlu0 %822
        %824 = vrot.lane.b32.xlu0 %v639, 112
        %v825 = vpop.permute.xlu0 %824
        %826 = vrot.lane.b32.xlu0 %v640, 112
        %v827 = vpop.permute.xlu0 %826
        %828 = vrot.lane.b32.xlu0 %v641, 112
        %v829 = vpop.permute.xlu0 %828
        %830 = vrot.lane.b32.xlu0 %v642, 112
        %v831 = vpop.permute.xlu0 %830
        %832 = vrot.lane.b32.xlu0 %v643, 112
        %v833 = vpop.permute.xlu0 %832
        %834 = vrot.lane.b32.xlu0 %v644, 112
        %v835 = vpop.permute.xlu0 %834
        %836 = vrot.lane.b32.xlu0 %v645, 112
        %v837 = vpop.permute.xlu0 %836
        %v838 = vsel %vm355, %v823, %v825
        %v839 = vsel %vm355, %v827, %v829
        %v840 = vsel %vm355, %v831, %v833
        %v841 = vsel %vm355, %v835, %v837
        %v850 = vsel %vm355, %v825, 0.0
        %v851 = vsel %vm355, %v829, 0.0
        %v852 = vsel %vm355, %v833, 0.0
        %v853 = vsel %vm355, %v837, 0.0
        %v854 = vld [vmem:[%s5] sm:$0x3]
        %856 = vset.pattern.permute.xlu0 0
        %857 = vperm.xlu0 %856, %v854
        %v858 = vpop.permute.xlu0 %857
        %v861 = vcombine.high %v557, %v557
        %v863 = vunpack.c.l.s4 1983009808
        %v864 = vunpack.c.0.s8 %v863
        %v865 = vlaneseq
        %v866 = vshrl.u32 %v865, 7
        %v867 = vsub.s32 %v864, %v866
        %v868 = vrot.slane %v557, %v867
        %v870 = vunpack.c.l.s4 1983009808
        %v871 = vunpack.c.0.s8 %v870
        %v872 = vlaneseq
        %v873 = vshrl.u32 %v872, 7
        %v874 = vsub.s32 %v871, %v873
        %v875 = vrot.slane %v861, %v874
        %v876 = vcombine.high %v868, %v868
        %vm879 = vcmask 261120
        %v880 = vsel %vm879, %v875, 0
        %882 = vmatprep.subr.mxu0 %v670
        %883 = vmatpush1.msra.mxu0 %v682
        %884 = vmatprep.subr.mxu0 %v671
        %885 = vmatpush1.msra.mxu0 %v683
        %886 = vmatprep.subr.mxu0 %v672
        %887 = vmatpush1.msra.mxu0 %v684
        %888 = vmatprep.subr.mxu0 %v673
        %889 = vmatpush1.msra.mxu0 %v685
        %890 = vmatprep.subr.mxu0 %v702
        %891 = vmatpush1.msra.mxu0 %v714
        %892 = vmatprep.subr.mxu0 %v703
        %893 = vmatpush1.msra.mxu0 %v715
        %894 = vmatprep.subr.mxu0 %v704
        %895 = vmatpush1.msra.mxu0 %v716
        %896 = vmatprep.subr.mxu0 %v705
        %897 = vmatpush1.msra.mxu0 %v717
        %898 = vmatprep.subr.mxu0 %v742
        %899 = vmatpush1.msra.mxu0 %v754
        %900 = vmatprep.subr.mxu0 %v743
        %901 = vmatpush1.msra.mxu0 %v755
        %902 = vmatprep.subr.mxu0 %v744
        %903 = vmatpush1.msra.mxu0 %v756
        %904 = vmatprep.subr.mxu0 %v745
        %905 = vmatpush1.msra.mxu0 %v757
        %906 = vmatprep.subr.mxu0 %v599
        %907 = vmatpush1.msra.mxu0 %v598
        %908 = vmatprep.subr.mxu0 %v601
        %909 = vmatpush1.msra.mxu0 %v600
        %910 = vmatprep.subr.mxu0 %v603
        %911 = vmatpush1.msra.mxu0 %v602
        %912 = vmatprep.subr.mxu0 %v605
        %913 = vmatpush1.msra.mxu0 %v604
        %914 = vmatprep.subr.mxu0 %v550
        %915 = vmatpush1.msra.mxu0 %v549
        %916 = vmatprep.subr.mxu0 %v552
        %917 = vmatpush1.msra.mxu0 %v551
        %918 = vmatprep.subr.mxu0 %v554
        %919 = vmatpush1.msra.mxu0 %v553
        %920 = vmatprep.subr.mxu0 %v556
        %921 = vmatpush1.msra.mxu0 %v555
        %922 = vmatprep.subr.mxu0 %v639
        %923 = vmatpush1.msra.mxu0 %v638
        %924 = vmatprep.subr.mxu0 %v641
        %925 = vmatpush1.msra.mxu0 %v640
        %926 = vmatprep.subr.mxu0 %v643
        %927 = vmatpush1.msra.mxu0 %v642
        %928 = vmatprep.subr.mxu0 %v645
        %929 = vmatpush1.msra.mxu0 %v644
        %930 = vmatprep.subr.mxu0 %v786
        %931 = vmatpush1.msra.mxu0 %v774
        %932 = vmatprep.subr.mxu0 %v787
        %933 = vmatpush1.msra.mxu0 %v775
        %934 = vmatprep.subr.mxu0 %v788
        %935 = vmatpush1.msra.mxu0 %v776
        %936 = vmatprep.subr.mxu0 %v789
        %937 = vmatpush1.msra.mxu0 %v777
        %938 = vmatprep.subr.mxu0 %v818
        %939 = vmatpush1.msra.mxu0 %v806
        %940 = vmatprep.subr.mxu0 %v819
        %941 = vmatpush1.msra.mxu0 %v807
        %942 = vmatprep.subr.mxu0 %v820
        %943 = vmatpush1.msra.mxu0 %v808
        %944 = vmatprep.subr.mxu0 %v821
        %945 = vmatpush1.msra.mxu0 %v809
        %946 = vmatprep.mubr.f32.mxu0 %v876
        %947 = vmatmul.mubr.f32.gmra.mrb[0].mxu0 %v868
        %v948 = vpop.f32.mrb[0].mxu0
        %v949 = vadd.f32 %v858, %v948
        %v950 = vpop.f32.mrb[0].mxu0
        %v951 = vadd.f32 %v858, %v950
        %952 = vdwg.mxu0
        %953 = vmatprep.subr.mxu0 %v850
        %954 = vmatpush1.msra.mxu0 %v838
        %955 = vmatprep.subr.mxu0 %v851
        %956 = vmatpush1.msra.mxu0 %v839
        %957 = vmatprep.subr.mxu0 %v852
        %958 = vmatpush1.msra.mxu0 %v840
        %959 = vmatprep.subr.mxu0 %v853
        %960 = vmatpush1.msra.mxu0 %v841
        %961 = vmatprep.subr.mxu0 0.0
        %962 = vmatpush1.msra.mxu0 0.0
        %963 = vmatprep.subr.mxu0 0.0
        %964 = vmatpush1.msra.mxu0 0.0
        %965 = vmatprep.subr.mxu0 0.0
        %966 = vmatpush1.msra.mxu0 0.0
        %967 = vmatprep.subr.mxu0 0.0
        %968 = vmatpush1.msra.mxu0 0.0
        %969 = vmatprep.subr.mxu0 0.0
        %970 = vmatpush1.msra.mxu0 0.0
        %971 = vmatprep.subr.mxu0 0.0
        %972 = vmatpush1.msra.mxu0 0.0
        %973 = vmatprep.subr.mxu0 0.0
        %974 = vmatpush1.msra.mxu0 0.0
        %975 = vmatprep.subr.mxu0 0.0
        %976 = vmatpush1.msra.mxu0 0.0
        %977 = vmatprep.subr.mxu0 0.0
        %978 = vmatpush1.msra.mxu0 0.0
        %979 = vmatprep.subr.mxu0 0.0
        %980 = vmatpush1.msra.mxu0 0.0
        %981 = vmatprep.subr.mxu0 0.0
        %982 = vmatpush1.msra.mxu0 0.0
        %983 = vmatprep.subr.mxu0 0.0
        %984 = vmatpush1.msra.mxu0 0.0
        %985 = vmatprep.subr.mxu0 0.0
        %986 = vmatpush1.msra.mxu0 0.0
        %987 = vmatprep.subr.mxu0 0.0
        %988 = vmatpush1.msra.mxu0 0.0
        %989 = vmatprep.subr.mxu0 0.0
        %990 = vmatpush1.msra.mxu0 0.0
        %991 = vmatprep.subr.mxu0 0.0
        %992 = vmatpush1.msra.mxu0 0.0
        %993 = vmatprep.subr.mxu0 0.0
        %994 = vmatpush1.msra.mxu0 0.0
        %995 = vmatprep.subr.mxu0 0.0
        %996 = vmatpush1.msra.mxu0 0.0
        %997 = vmatprep.subr.mxu0 0.0
        %998 = vmatpush1.msra.mxu0 0.0
        %999 = vmatprep.subr.mxu0 0.0
        %1000 = vmatpush1.msra.mxu0 0.0
        %1001 = vmatprep.subr.mxu0 0.0
        %1002 = vmatpush1.msra.mxu0 0.0
        %1003 = vmatprep.subr.mxu0 0.0
        %1004 = vmatpush1.msra.mxu0 0.0
        %1005 = vmatprep.subr.mxu0 0.0
        %1006 = vmatpush1.msra.mxu0 0.0
        %1007 = vmatprep.subr.mxu0 0.0
        %1008 = vmatpush1.msra.mxu0 0.0
        %1009 = vmatprep.subr.mxu0 0.0
        %1010 = vmatpush1.msra.mxu0 0.0
        %1011 = vmatprep.subr.mxu0 0.0
        %1012 = vmatpush1.msra.mxu0 0.0
        %1013 = vmatprep.subr.mxu0 0.0
        %1014 = vmatpush1.msra.mxu0 0.0
        %1015 = vmatprep.subr.mxu0 0.0
        %1016 = vmatpush1.msra.mxu0 0.0
        %1017 = vmatprep.mubr.f32.mxu0 0.0
        %1018 = vmatmul.mubr.f32.gmra.mrb[0].mxu0 %v880
        %v1019 = vpop.f32.mrb[0].mxu0
        %v1020 = vadd.f32 %v949, %v1019
        %v1021 = vpop.f32.mrb[0].mxu0
        %v1022 = vadd.f32 %v951, %v1021
        %1023 = vdwg.mxu0
        %v1026 = vcombine.low %v1020, %v1022
        %v1028 = vunpack.c.l.s4 1983009808
        %v1029 = vunpack.c.0.s8 %v1028
        %v1030 = vlaneseq
        %v1031 = vshrl.u32 %v1030, 7
        %v1032 = vsub.s32 %v1029, %v1031
        %v1033 = vrot.slane %v1026, %v1032
        %1035 = vst [vmem:[%s244] sm:$0xf] %v1033
        %s1036 = sand.u32 %s159, 1
        %s1037 = scalar_lea.sflag [#allocation3], %s1036
        %s1038 = sand.u32 %s159, 1
        %s1039 = smul.addr %s1038, 4
        %s1040 = scalar_lea.vmem [#allocation2], %s1039
        // Predicated region
        $region45: #{tpu_custom_call.1} parent=43 // pred_check
          %p1041 = pneg %p169
        $region46: #{tpu_custom_call.1} parent=43 // pred_check_branch
          %1043 = sbr.rel (%p1041) target = $region48
        $region47: #{tpu_custom_call.1} parent=43 // pred_region
          %s1045 = ssub.s32 64, 64
          %1046 = vsyncadd %s1037, %s1045
          %s1047 = smul.addr %s20, 2
          %s1048 = smul.addr %s1047, 32
          %s1049 = scalar_lea.hbm %s6, %s1048
          %s1051 = sshll.u32 %s1040, 4
          %s1052 = int_to_ptr.vmem [resolvable:$true] %s1051
          %1054 = dma.vmem_to_hbm [thread:$0]  %s1052, 64, %s1049, %s1037
        $region48: #{tpu_custom_call.1} parent=43 // pred_fallthru
          _
      $region44: #{tpu_custom_call.1} parent=5 // pred_fallthru
        _
      %p1055 = scmp.le.s32.totalorder 2, %s15
      // Predicated region
      $region49: #{tpu_custom_call.1} parent=5 // pred_check
        %p1056 = pneg %p1055
      $region50: #{tpu_custom_call.1} parent=5 // pred_check_branch
        %1058 = sbr.rel (%p1056) target = $region52
      $region51: #{tpu_custom_call.1} parent=5 // pred_region
        %s1059 = ssub.s32 %s15, 2
        // Predicated region
        $region53: #{tpu_custom_call.1} parent=51 // pred_check
          %p1060 = pneg %p175
        $region54: #{tpu_custom_call.1} parent=51 // pred_check_branch
          %1062 = sbr.rel (%p1060) target = $region56
        $region55: #{tpu_custom_call.1} parent=51 // pred_region
          %s1063 = sand.u32 %s160, 1
          %s1064 = scalar_lea.sflag [#allocation3], %s1063
          %s1065 = sand.u32 %s160, 1
          %s1066 = smul.addr %s1065, 4
          %s1067 = scalar_lea.vmem [#allocation2], %s1066
          %1068 = dma.done %s1064, 64
        $region56: #{tpu_custom_call.1} parent=51 // pred_fallthru
          _
      $region52: #{tpu_custom_call.1} parent=5 // pred_fallthru
        _
    $region6: #{tpu_custom_call.1} parent=1 // loop_footer
      %s19 = sadd.s32 1, %s15
    $region7: #{tpu_custom_call.1} parent=1 // loop_footer_branch
      %14 = sbr.rel target = $region3
    $region8: #{tpu_custom_call.1} parent=1 // loop_exit
      _
    %1069 = vsyncpa [#allocation3], 1
    %s1070 = scalar_lea.sflag [#allocation3], 1
    %1071 = vsyncpa %s1070, 1

</llo_original>
